<compile_context>
chip_gen: v6e
topology: v6e:2x2x1
jax: 0.10.0
libtpu: 0.0.40
codegen_flags: <defaults>
</compile_context>

<pallas_src>
import functools

import jax
import jax.numpy as jnp
from jax.experimental import pallas as pl
from jax.experimental.pallas import tpu as pltpu


def _rmsnorm_kernel(x_ref, a_ref, b_ref, o_ref, *, coeff, eps,
                    native_elementwise):
    # x_ref: (tile_rows, F) tile; a_ref/b_ref: (1, F), VMEM-resident.
    x = x_ref[...]
    x32 = x.astype(jnp.float32)

    # Sum of squares along the feature (lane) axis, f32 accumulation.
    sumsq = jnp.sum(x32 * x32, axis=-1, keepdims=True)
    d = coeff * jnp.sqrt(sumsq) + eps                     # rms + eps

    # EUP reciprocal + 1 Newton-Raphson step => ~f32-exact 1/(rms+eps)
    # without occupying the VALU with a divide sequence.
    inv = pl.reciprocal(d, approx=True)
    inv = inv * (2.0 - d * inv)

    if native_elementwise:
        # bf16/int8/fp8 path on v6e/v7x: keep scale/shift in the native dtype
        # (error is below the output rounding), avoiding full-tile f32 temps.
        o_ref[...] = (a_ref[...] * x * inv.astype(x.dtype)
                      + b_ref[...]).astype(o_ref.dtype)
    else:
        o_ref[...] = (a_ref[...] * x32 * inv + b_ref[...]).astype(o_ref.dtype)


def _round_up(x, m):
    return (x + m - 1) // m * m


def _vmem_capacity_bytes():
    """Per-TensorCore VMEM capacity; conservative fallback if the query fails."""
    try:
        return int(pltpu.get_tpu_info().vmem_capacity_bytes)
    except Exception:
        return 64 * 1024 * 1024          # v7x per-TC size (smallest current gen)


def _use_native_elementwise(dtype):
    """Keep scale/shift in the native low-precision dtype only on v6e/v7x."""
    if jnp.dtype(dtype) == jnp.dtype(jnp.float32):
        return False
    try:
        kind = jax.devices()[0].device_kind.lower()
    except Exception:
        return False
    return ("v6" in kind) or ("v7" in kind)


def _choose_tile_rows(n_rows, features, itemsize, native_elementwise,
                      budget_bytes):
    """Largest row tile inside the VMEM budget, with >=2 (even) grid steps."""
    # Minimum sublane pack per dtype width (f32:8, bf16:16, int8/fp8:32).
    row_pack = {4: 8, 2: 16, 1: 32}.get(itemsize, 8)

    # Working set per row: double-buffered in+out tiles in the native dtype
    # plus the f32 temporaries the body materializes (x32, x32*x32, f32 out
    # ~= 12 B/feature on the f32 path; ~4 B/feature on the native path).
    f32_temp_bytes = 4 if native_elementwise else 12
    per_row_bytes = features * (4 * itemsize + f32_temp_bytes)

    t_budget = max((budget_bytes // per_row_bytes) // row_pack * row_pack,
                   row_pack)

    # Tiny inputs: one full-extent block (pipelining / megacore irrelevant,
    # and a full-extent block shape is always legal).
    if n_rows * features * itemsize <= 2 * 1024 * 1024 and n_rows <= t_budget:
        return n_rows

    # Guarantee >= 2 grid steps so block i's compute/writeback hides under
    # block i+1's fetch, and an even step count so v7x's two TensorCores
    # (row axis is "parallel") get balanced work.
    n_steps = max(-(-n_rows // t_budget), 2)
    n_steps += n_steps % 2
    t = -(-n_rows // n_steps)
    t = max(_round_up(t, row_pack), row_pack)
    return min(t, t_budget)


def rmsnorm(x, a_2, b_2, eps=1e-6, *, tile_rows=None):
    """RMSNorm over the last axis of x. a_2/b_2 have shape (features,)."""
    features = x.shape[-1]
    coeff = float(features) ** (-0.5)

    orig_shape = x.shape
    x2 = x.reshape(-1, features)                          # (tokens, F), lanes = F
    n_rows = x2.shape[0]
    itemsize = jnp.dtype(x2.dtype).itemsize

    native = _use_native_elementwise(x2.dtype)

    # Generation-aware VMEM budgeting: ~35% of capacity for the tile working
    # set, scoped limit at ~70% (89 MiB on 128 MiB v5e/v6e, 44 MiB on v7x's
    # 64 MiB per-TC VMEM) leaving slack for Mosaic internal scratch.
    vmem_cap = _vmem_capacity_bytes()
    vmem_limit = int(0.70 * vmem_cap)
    budget_bytes = int(0.35 * vmem_cap)

    if tile_rows is None:
        tile_rows = _choose_tile_rows(n_rows, features, itemsize, native,
                                      budget_bytes)

    # Pre-cast the scale/shift once in the wrapper (the grid is a sequential
    # loop on the TC, so an in-kernel cast would re-run every step).  They stay
    # VMEM-resident via the constant index_map.
    param_dtype = x2.dtype if native else jnp.float32
    a2d = a_2.astype(param_dtype).reshape(1, features)
    b2d = b_2.astype(param_dtype).reshape(1, features)

    kernel = functools.partial(_rmsnorm_kernel, coeff=coeff, eps=eps,
                               native_elementwise=native)

    out = pl.pallas_call(
        kernel,
        out_shape=jax.ShapeDtypeStruct((n_rows, features), x.dtype),
        grid_spec=pltpu.PrefetchScalarGridSpec(
            num_scalar_prefetch=0,
            # No padding: the last block may be partial; Pallas masks the
            # out-of-range rows (rows are independent, clipped writes never
            # reach the output).
            grid=(pl.cdiv(n_rows, tile_rows),),
            in_specs=[
                pl.BlockSpec((tile_rows, features), lambda i: (i, 0)),
                pl.BlockSpec((1, features), lambda i: (0, 0)),   # VMEM-resident
                pl.BlockSpec((1, features), lambda i: (0, 0)),   # VMEM-resident
            ],
            out_specs=pl.BlockSpec((tile_rows, features), lambda i: (i, 0)),
        ),
        compiler_params=pltpu.CompilerParams(
            # "parallel" lets v7x shard the row grid across its 2 TensorCores;
            # ~neutral on single-TC v5e/v6e.
            dimension_semantics=("parallel",),
            vmem_limit_bytes=vmem_limit,
        ),
    )(x2, a2d, b2d)

    return out.reshape(orig_shape)


if __name__ == "__main__":
    # Small shapes consistent with the module: (batch, seq, hidden) with a
    # lane-dense hidden dim.  seq=9 gives 18 rows (not a multiple of 8) so the
    # partial-tail path can be exercised with a forced small tile.
    batch, seq, hidden = 2, 9, 128
    key = jax.random.PRNGKey(0)
    x = jax.random.normal(key, (batch, seq, hidden), dtype=jnp.float32)

    # nn.Parameter(ones) / nn.Parameter(zeros)
    a_2 = jnp.ones((hidden,), dtype=jnp.float32)
    b_2 = jnp.zeros((hidden,), dtype=jnp.float32)

    # Pure-JAX reference of the exact PyTorch semantics.
    norm = jnp.linalg.norm(x, ord=2, axis=-1, keepdims=True)
    rms = (hidden ** -0.5) * norm
    ref = a_2 * x / (rms + 1e-6) + b_2

    # 1) Auto-sized tiles (tiny input -> single full-extent block of 18 rows).
    out = jax.block_until_ready(rmsnorm(x, a_2, b_2, eps=1e-6))
    assert jnp.allclose(out, ref, atol=1e-4, rtol=1e-4), "mismatch (auto tile)"

    # 2) Forced small tile to exercise the masked partial tail block
    #    (grid = cdiv(18, 8) = 3, last block covers only 2 valid rows).
    out2 = jax.block_until_ready(rmsnorm(x, a_2, b_2, eps=1e-6, tile_rows=8))
    assert jnp.allclose(out2, ref, atol=1e-4, rtol=1e-4), "mismatch (partial tail)"

    # 3) bf16 input: exercises the native low-precision elementwise path on
    #    v6e/v7x and the f32 fallback on v5e.
    xb = x.astype(jnp.bfloat16)
    out3 = jax.block_until_ready(
        rmsnorm(xb, a_2.astype(jnp.bfloat16), b_2.astype(jnp.bfloat16), eps=1e-6))
    refb = ref.astype(jnp.bfloat16).astype(jnp.float32)
    assert jnp.allclose(out3.astype(jnp.float32), refb, atol=5e-2, rtol=5e-2), \
        "mismatch (bf16)"

    print("KERNEL_OK")
</pallas_src>

<mosaic_0001>
module attributes {stable_mosaic.version = 11 : i64} {
  func.func @_rmsnorm_kernel(%arg0: i32, %arg1: memref<18x128xf32, #tpu.memory_space<vmem>>, %arg2: memref<1x128xf32, #tpu.memory_space<vmem>>, %arg3: memref<1x128xf32, #tpu.memory_space<vmem>>, %arg4: memref<18x128xf32, #tpu.memory_space<vmem>>) attributes {dimension_semantics = [#tpu.dimension_semantics<parallel>], iteration_bounds = array<i64: 1>, scalar_prefetch = 0 : i64, scratch_operands = 0 : i64, tpu.core_type = #tpu.core_type<tc>, window_params = [{transform_indices = @transform_0, window_bounds = array<i64: 18, 128>}, {pipeline_mode = #tpu.pipeline_mode<synchronous>, transform_indices = @transform_1, window_bounds = array<i64: 1, 128>}, {pipeline_mode = #tpu.pipeline_mode<synchronous>, transform_indices = @transform_2, window_bounds = array<i64: 1, 128>}, {transform_indices = @transform_3, window_bounds = array<i64: 18, 128>}]} {
    %c0 = arith.constant 0 : index
    %c0_0 = arith.constant 0 : index
    %0 = vector.load %arg1[%c0, %c0_0] : memref<18x128xf32, #tpu.memory_space<vmem>>, vector<18x128xf32>
    %1 = arith.mulf %0, %0 : vector<18x128xf32>
    %cst = arith.constant dense<0.000000e+00> : vector<18xf32>
    %2 = vector.multi_reduction <add>, %1, %cst [1] : vector<18x128xf32> to vector<18xf32>
    %3 = vector.shape_cast %2 : vector<18xf32> to vector<18x1xf32>
    %4 = math.sqrt %3 : vector<18x1xf32>
    %cst_1 = arith.constant 0.0883883461 : f32
    %5 = vector.broadcast %cst_1 : f32 to vector<18x1xf32>
    %6 = arith.mulf %5, %4 : vector<18x1xf32>
    %cst_2 = arith.constant 9.99999997E-7 : f32
    %7 = vector.broadcast %cst_2 : f32 to vector<18x1xf32>
    %8 = arith.addf %6, %7 : vector<18x1xf32>
    %9 = tpu.reciprocal %8 {approx = true} : vector<18x1xf32> -> vector<18x1xf32>
    %10 = arith.mulf %8, %9 : vector<18x1xf32>
    %cst_3 = arith.constant 2.000000e+00 : f32
    %11 = vector.broadcast %cst_3 : f32 to vector<18x1xf32>
    %12 = arith.subf %11, %10 : vector<18x1xf32>
    %13 = arith.mulf %9, %12 : vector<18x1xf32>
    %c0_4 = arith.constant 0 : index
    %c0_5 = arith.constant 0 : index
    %14 = vector.load %arg2[%c0_4, %c0_5] : memref<1x128xf32, #tpu.memory_space<vmem>>, vector<1x128xf32>
    %15 = vector.broadcast %14 : vector<1x128xf32> to vector<18x128xf32>
    %16 = arith.mulf %15, %0 : vector<18x128xf32>
    %17 = vector.broadcast %13 : vector<18x1xf32> to vector<18x128xf32>
    %18 = arith.mulf %16, %17 : vector<18x128xf32>
    %c0_6 = arith.constant 0 : index
    %c0_7 = arith.constant 0 : index
    %19 = vector.load %arg3[%c0_6, %c0_7] : memref<1x128xf32, #tpu.memory_space<vmem>>, vector<1x128xf32>
    %20 = vector.broadcast %19 : vector<1x128xf32> to vector<18x128xf32>
    %21 = arith.addf %18, %20 : vector<18x128xf32>
    %c0_8 = arith.constant 0 : index
    %c0_9 = arith.constant 0 : index
    %22 = vector.load %arg4[%c0_8, %c0_9] : memref<18x128xf32, #tpu.memory_space<vmem>>, vector<18x128xf32>
    tpu.vector_store %arg4[%c0_8, %c0_9], %21 {strides = array<i32>} : memref<18x128xf32, #tpu.memory_space<vmem>>, vector<18x128xf32>,
    return
  }
  func.func @transform_0(%arg0: i32) -> (i32, i32) {
    %c0_i32 = arith.constant 0 : i32
    %c0_i32_0 = arith.constant 0 : i32
    return %arg0, %c0_i32 : i32, i32
  }
  func.func @transform_1(%arg0: i32) -> (i32, i32) {
    %c0_i32 = arith.constant 0 : i32
    %c0_i32_0 = arith.constant 0 : i32
    %c0_i32_1 = arith.constant 0 : i32
    return %c0_i32, %c0_i32_0 : i32, i32
  }
  func.func @transform_2(%arg0: i32) -> (i32, i32) {
    %c0_i32 = arith.constant 0 : i32
    %c0_i32_0 = arith.constant 0 : i32
    %c0_i32_1 = arith.constant 0 : i32
    return %c0_i32, %c0_i32_0 : i32, i32
  }
  func.func @transform_3(%arg0: i32) -> (i32, i32) {
    %c0_i32 = arith.constant 0 : i32
    %c0_i32_0 = arith.constant 0 : i32
    return %arg0, %c0_i32 : i32, i32
  }
}

</mosaic_0001>

<llo_original>
// kernel: tpu_custom_call.1
$region0: #{tpu_custom_call.1}
  #allocation0 [shape = 'u32[]', space=smem, size = 0x4, offset = 0x4, fixed_abs, tag = 'smem constant byte address 0x4 - core index']
  #allocation1 [shape = 'u32[144,128]{1,0:T(1,128)}', space=vmem, size = 0x12000, scoped, tag = 'internal scratch']
  %s0 = inlined_call_operand.hbm [shape: f32[18,128], index: 0, kind: input, shape index: {}]
  %s1 = inlined_call_operand.vmem [shape: f32[1,128], index: 1, kind: input, shape index: {}]
  %s2 = inlined_call_operand.vmem [shape: f32[1,128], index: 2, kind: input, shape index: {}]
  %s3 = inlined_call_operand.hbm [shape: f32[18,128], index: 3, kind: output, shape index: {}]
  %s4 = sld [smem:[#allocation0]]
  $region26: #{tpu_custom_call.1} parent=0
    _
  %s6 = ssub.s32 1, %s4
  %s7 = scalar_select 0, %s6, %s4
  $region1: #{tpu_custom_call.1} parent=0
    #allocation2 [shape = 'u8[12288]{0}', space=vmem, size = 0x3000, scoped, tag = 'input window, operand 0, single buffered']
    #allocation3 [shape = 's32[1]{0}', space=sflag, size = 0x4, scoped, tag = 'scoped memory for tpu_custom_call.1']
    #allocation4 [shape = 's32[1]{0}', space=sflag, size = 0x4, scoped, tag = 'scoped memory for tpu_custom_call.1']
    #allocation5 [shape = 'u8[12288]{0}', space=vmem, size = 0x3000, scoped, tag = 'output window, operand 0, single buffered']
    %8 = vsyncpa [#allocation3], 0
    %9 = vsyncpa [#allocation4], 0
    // Predicated region
    $region2: #{tpu_custom_call.1} parent=1 // pred_check
      _
    $region3: #{tpu_custom_call.1} parent=1 // pred_check_branch
      %11 = sbr.rel (0) target = $region5
    $region4: #{tpu_custom_call.1} parent=1 // pred_region
      %s13 = ssub.s32 384, 384
      %14 = vsyncadd [#allocation3], %s13
      %s15 = sshll.u32 [#allocation2], 4
      %s16 = int_to_ptr.vmem [resolvable:$true] %s15
      %21 = dma.hbm_to_vmem [thread:$0]  %s0, 384, %s16, [#allocation3], 128, 128, 8
    $region5: #{tpu_custom_call.1} parent=1 // pred_fallthru
      _
    // Predicated region
    $region6: #{tpu_custom_call.1} parent=1 // pred_check
      _
    $region7: #{tpu_custom_call.1} parent=1 // pred_check_branch
      %23 = sbr.rel (0) target = $region9
    $region8: #{tpu_custom_call.1} parent=1 // pred_region
      _
    $region9: #{tpu_custom_call.1} parent=1 // pred_fallthru
      _
    // Predicated region
    $region10: #{tpu_custom_call.1} parent=1 // pred_check
      _
    $region11: #{tpu_custom_call.1} parent=1 // pred_check_branch
      %25 = sbr.rel (0) target = $region13
    $region12: #{tpu_custom_call.1} parent=1 // pred_region
      _
    $region13: #{tpu_custom_call.1} parent=1 // pred_fallthru
      _
    // Predicated region
    $region14: #{tpu_custom_call.1} parent=1 // pred_check
      _
    $region15: #{tpu_custom_call.1} parent=1 // pred_check_branch
      %27 = sbr.rel (0) target = $region17
    $region16: #{tpu_custom_call.1} parent=1 // pred_region
      %28 = dma.done [#allocation3], 384
    $region17: #{tpu_custom_call.1} parent=1 // pred_fallthru
      _
    %v29 = vld [vmem:[#allocation2] sm:$0xff]
    %v30 = vld [vmem:[#allocation2 + $0x8] sm:$0xff]
    %v31 = vld [vmem:[#allocation2 + $0x10] sm:$0x3]
    %v32 = vmul.f32 %v29, %v29
    %v33 = vmul.f32 %v30, %v30
    %v34 = vmul.f32 %v31, %v31
    %35 = vadd.xlane.f32.xlu0 %v32
    %v36 = vpop.xlane.xlu0 %35
    %37 = vadd.xlane.f32.xlu0 %v33
    %v38 = vpop.xlane.xlu0 %37
    %vm39 = vcmask 1041408
    %v40 = vsel %vm39, %v34, 0.0
    %41 = vadd.xlane.f32.xlu0 %v40
    %v42 = vpop.xlane.xlu0 %41
    %v43 = vrsqrt.pop %v36
    %v44 = vmul.f32 %v36, %v43
    %vm45 = vcmp.eq.f32.partialorder %v36, inf
    %v46 = vsel %vm45, %v36, %v44
    %vm47 = vcmp.eq.f32.partialorder %v36, 0.0
    %v48 = vand.u32 %v36, 2147483648
    %v49 = vsel %vm47, %v48, %v46
    %v50 = vrsqrt.pop %v38
    %v51 = vmul.f32 %v38, %v50
    %vm52 = vcmp.eq.f32.partialorder %v38, inf
    %v53 = vsel %vm52, %v38, %v51
    %vm54 = vcmp.eq.f32.partialorder %v38, 0.0
    %v55 = vand.u32 %v38, 2147483648
    %v56 = vsel %vm54, %v55, %v53
    %v57 = vrsqrt.pop %v42
    %v58 = vmul.f32 %v42, %v57
    %vm59 = vcmp.eq.f32.partialorder %v42, inf
    %v60 = vsel %vm59, %v42, %v58
    %vm61 = vcmp.eq.f32.partialorder %v42, 0.0
    %v62 = vand.u32 %v42, 2147483648
    %v63 = vsel %vm61, %v62, %v60
    %v64 = vmul.f32 %v49, 0.088388346
    %v65 = vmul.f32 %v56, 0.088388346
    %v66 = vmul.f32 %v63, 0.088388346
    %v67 = vadd.f32 %v64, 1e-06
    %v68 = vadd.f32 %v65, 1e-06
    %v69 = vadd.f32 %v66, 1e-06
    %v70 = vrcp.pop %v67
    %v71 = vrcp.pop %v68
    %v72 = vrcp.pop %v69
    %v73 = vmul.f32 %v67, %v70
    %v74 = vmul.f32 %v68, %v71
    %v75 = vmul.f32 %v69, %v72
    %v76 = vsub.f32 2.0, %v73
    %v77 = vsub.f32 2.0, %v74
    %v78 = vsub.f32 2.0, %v75
    %v79 = vmul.f32 %v70, %v76
    %v80 = vmul.f32 %v71, %v77
    %v81 = vmul.f32 %v72, %v78
    %v82 = vld [vmem:[%s1] sm:$0x1]
    %v84 = vlaneseq
    %v85 = vshrl.u32 %v84, 7
    %v86 = vsub.s32 0, %v85
    %v87 = vrot.slane %v82, %v86
    %v89 = vmul.f32 %v87, %v29
    %v90 = vmul.f32 %v87, %v30
    %v91 = vmul.f32 %v87, %v31
    %v92 = vmul.f32 %v89, %v79
    %v93 = vmul.f32 %v90, %v80
    %v94 = vmul.f32 %v91, %v81
    %v95 = vld [vmem:[%s2] sm:$0x1]
    %v97 = vlaneseq
    %v98 = vshrl.u32 %v97, 7
    %v99 = vsub.s32 0, %v98
    %v100 = vrot.slane %v95, %v99
    %v102 = vadd.f32 %v92, %v100
    %v103 = vadd.f32 %v93, %v100
    %v104 = vadd.f32 %v94, %v100
    %105 = vst [vmem:[#allocation5] sm:$0xff] %v102
    %106 = vst [vmem:[#allocation5 + $0x8] sm:$0xff] %v103
    %107 = vst [vmem:[#allocation5 + $0x10] sm:$0x3] %v104
    // Predicated region
    $region18: #{tpu_custom_call.1} parent=1 // pred_check
      _
    $region19: #{tpu_custom_call.1} parent=1 // pred_check_branch
      %109 = sbr.rel (0) target = $region21
    $region20: #{tpu_custom_call.1} parent=1 // pred_region
      %s111 = ssub.s32 384, 384
      %112 = vsyncadd [#allocation4], %s111
      %s113 = sshll.u32 [#allocation5], 4
      %s114 = int_to_ptr.vmem [resolvable:$true] %s113
      %119 = dma.vmem_to_hbm [thread:$0]  %s114, 384, %s3, [#allocation4], 128, 128, 8
    $region21: #{tpu_custom_call.1} parent=1 // pred_fallthru
      _
    // Predicated region
    $region22: #{tpu_custom_call.1} parent=1 // pred_check
      _
    $region23: #{tpu_custom_call.1} parent=1 // pred_check_branch
      %121 = sbr.rel (0) target = $region25
    $region24: #{tpu_custom_call.1} parent=1 // pred_region
      %122 = dma.done [#allocation4], 384
    $region25: #{tpu_custom_call.1} parent=1 // pred_fallthru
      _
    %123 = vsyncpa [#allocation3], 1
    %124 = vsyncpa [#allocation4], 1

</llo_original>
